<compile_context>
chip_gen: v6e
topology: v6e:2x2x1
jax: 0.10.0
libtpu: 0.0.40
codegen_flags: <defaults>
</compile_context>

<pallas_src>
import functools

import jax
import jax.numpy as jnp
from jax.experimental import pallas as pl
from jax.experimental.pallas import tpu as pltpu


# -----------------------------------------------------------------------------
# Kernel 1: h = dropout(x) @ W, plus per-node attention logits a_src / a_dst.
# -----------------------------------------------------------------------------
def _dropout_linear_kernel(x_ref, dropm_ref, w_ref, att_src_ref, att_dst_ref,
                           h_ref, asrc_ref, adst_ref):
    # Feature dropout: mask is pre-scaled by 1/(1-p) in the wrapper.
    x = x_ref[...] * dropm_ref[...]                                   # f32 [TM, Fin]
    # bf16 MXU matmul with f32 accumulation.
    h = jnp.dot(x.astype(jnp.bfloat16), w_ref[...],
                preferred_element_type=jnp.float32)                   # f32 [TM, Fout]
    h_ref[...] = h.astype(jnp.bfloat16)
    # Hoisted attention logits (computed once per node, in f32).
    adst_ref[...] = jnp.sum(h * att_dst_ref[...], axis=-1, keepdims=True)   # [TM, 1]
    a_src = jnp.sum(h * att_src_ref[...], axis=-1, keepdims=True)           # [TM, 1]
    asrc_ref[...] = a_src.reshape(asrc_ref.shape)                           # [1, TM]


# -----------------------------------------------------------------------------
# Kernel 2: dense masked GAT attention + aggregation (single head).
# -----------------------------------------------------------------------------
def _gat_attention_kernel(h_ref, asrc_ref, adst_ref, maskb_ref, dropm_ref,
                          bias_ref, y_ref, *, neg_slope):
    # Attention logits for this destination tile against all sources.
    e = adst_ref[...] + asrc_ref[...]                         # f32 [TM, N]
    e = jnp.where(e > 0, e, neg_slope * e)                    # LeakyReLU(0.2)
    s = e + maskb_ref[...]                                    # additive mask (0 / -1e30)

    # Masked softmax over in-neighbours (self loop keeps the row max finite,
    # so masked entries underflow to exactly 0 after exp -> no re-mask needed).
    m = jnp.max(s, axis=-1, keepdims=True)
    p = jnp.exp(s - m)
    alpha = p / jnp.sum(p, axis=-1, keepdims=True)

    # Attention-coefficient dropout (GATConv dropout=0.6, training=True),
    # mask pre-scaled by 1/(1-p) in the wrapper.
    alpha = alpha * dropm_ref[...]

    # Weighted aggregation: bf16 MXU matmul with f32 accumulation, plus bias.
    y = jnp.dot(alpha.astype(jnp.bfloat16), h_ref[...],
                preferred_element_type=jnp.float32)            # [TM, Fout]
    y_ref[...] = y + bias_ref[...]


# -----------------------------------------------------------------------------
# Kernel 3: PairNorm ('PN', scale) + ReLU   (global reductions -> one full block)
# -----------------------------------------------------------------------------
def _pairnorm_relu_kernel(y_ref, o_ref, *, scale, n_rows):
    # TODO(synk): for large N replace with a tiled two-pass scheme (partial column
    # sums / row sum-of-squares, tiny finalize, row-tiled apply).
    y = y_ref[...]
    col_mean = jnp.sum(y, axis=0, keepdims=True) * (1.0 / n_rows)      # [1, F]
    centered = y - col_mean
    row_sq = jnp.sum(centered * centered, axis=1, keepdims=True)       # [N, 1]
    mean_sq = jnp.sum(row_sq, axis=0, keepdims=True) * (1.0 / n_rows)  # [1, 1]
    inv_norm = jax.lax.rsqrt(1e-6 + mean_sq)                           # [1, 1]
    o_ref[...] = jnp.maximum(centered * (scale * inv_norm), 0.0)


# -----------------------------------------------------------------------------
# Wrapper
# -----------------------------------------------------------------------------
def gat_norm_forward(x, adj, w, att_src, att_dst, bias, *,
                     dropout=0.5, att_dropout=0.6, neg_slope=0.2,
                     norm_scale=1.0, key=None, tile_m=128):
    n, f_in = x.shape
    f_out = w.shape[1]
    assert n % tile_m == 0, "node count must be a multiple of the row tile"

    if key is None:
        key = jax.random.PRNGKey(0)
    k_feat, k_att = jax.random.split(key)

    # Dropout masks, pre-scaled by 1/(1-p).  Generated with jax.random in the
    # wrapper (portable; the on-chip PRNG has no CPU/interpret lowering).
    # TODO(synk): cannot reproduce torch's RNG stream.
    if dropout > 0.0:
        keep = jax.random.bernoulli(k_feat, 1.0 - dropout, (n, f_in))
        drop_x = keep.astype(jnp.float32) * (1.0 / (1.0 - dropout))
    else:
        drop_x = jnp.ones((n, f_in), jnp.float32)
    if att_dropout > 0.0:
        keep_a = jax.random.bernoulli(k_att, 1.0 - att_dropout, (n, n))
        drop_att = keep_a.astype(jnp.float32) * (1.0 / (1.0 - att_dropout))
    else:
        drop_att = jnp.ones((n, n), jnp.float32)

    # Additive edge mask: destination i receives from source j iff adj[j, i] != 0
    # (dense_to_sparse convention), plus self loops (GATConv add_self_loops=True).
    edge_mask = (adj.T != 0.0) | jnp.eye(n, dtype=bool)
    mask_bias = jnp.where(edge_mask, 0.0, -1e30).astype(jnp.float32)

    w_bf = w.astype(jnp.bfloat16)     # cast the matmul weight once, outside the grid loop

    # --- 1) h = dropout(x) @ W,  a_src, a_dst  (row-tiled, parallel) ----------
    h, a_src, a_dst = pl.pallas_call(
        _dropout_linear_kernel,
        out_shape=(jax.ShapeDtypeStruct((n, f_out), jnp.bfloat16),
                   jax.ShapeDtypeStruct((1, n), jnp.float32),
                   jax.ShapeDtypeStruct((n, 1), jnp.float32)),
        grid=(n // tile_m,),
        in_specs=[pl.BlockSpec((tile_m, f_in), lambda i: (i, 0)),    # x tile
                  pl.BlockSpec((tile_m, f_in), lambda i: (i, 0)),    # dropout mask tile
                  pl.BlockSpec((f_in, f_out), lambda i: (0, 0)),     # W (bf16)
                  pl.BlockSpec((1, f_out), lambda i: (0, 0)),        # att_src
                  pl.BlockSpec((1, f_out), lambda i: (0, 0))],       # att_dst
        out_specs=[pl.BlockSpec((tile_m, f_out), lambda i: (i, 0)),  # h
                   pl.BlockSpec((1, tile_m), lambda i: (0, i)),      # a_src
                   pl.BlockSpec((tile_m, 1), lambda i: (i, 0))],     # a_dst
        compiler_params=pltpu.CompilerParams(dimension_semantics=("parallel",)),
    )(x, drop_x, w_bf, att_src, att_dst)

    # --- 2) masked GAT attention + aggregation (row-tiled, parallel) ----------
    y = pl.pallas_call(
        functools.partial(_gat_attention_kernel, neg_slope=float(neg_slope)),
        out_shape=jax.ShapeDtypeStruct((n, f_out), jnp.float32),
        grid=(n // tile_m,),
        in_specs=[pl.BlockSpec((n, f_out), lambda i: (0, 0)),        # h (all sources, bf16)
                  pl.BlockSpec((1, n), lambda i: (0, 0)),            # a_src (all sources)
                  pl.BlockSpec((tile_m, 1), lambda i: (i, 0)),       # a_dst tile
                  pl.BlockSpec((tile_m, n), lambda i: (i, 0)),       # additive mask tile
                  pl.BlockSpec((tile_m, n), lambda i: (i, 0)),       # attn dropout tile
                  pl.BlockSpec((1, f_out), lambda i: (0, 0))],       # bias
        out_specs=pl.BlockSpec((tile_m, f_out), lambda i: (i, 0)),
        compiler_params=pltpu.CompilerParams(
            dimension_semantics=("parallel",),
            vmem_limit_bytes=64 * 1024 * 1024),
    )(h, a_src, a_dst, mask_bias, drop_att, bias)

    # --- 3) PairNorm('PN') + ReLU ---------------------------------------------
    out = pl.pallas_call(
        functools.partial(_pairnorm_relu_kernel, scale=float(norm_scale),
                          n_rows=float(n)),
        out_shape=jax.ShapeDtypeStruct((n, f_out), jnp.float32),
        grid=(1,),
        in_specs=[pl.BlockSpec((n, f_out), lambda i: (0, 0))],
        out_specs=pl.BlockSpec((n, f_out), lambda i: (0, 0)),
        compiler_params=pltpu.CompilerParams(vmem_limit_bytes=64 * 1024 * 1024),
    )(y)

    # adj is returned unchanged (pure passthrough — no compute, no copy).
    return out, adj


if __name__ == "__main__":
    key = jax.random.PRNGKey(0)
    kx, ka, kw, ks, kd, kb, kdrop = jax.random.split(key, 7)

    # Small shapes consistent with the module: N nodes x nhid features.
    n_nodes, nhid = 256, 128
    x = jax.random.normal(kx, (n_nodes, nhid), dtype=jnp.float32)
    adj = (jax.random.uniform(ka, (n_nodes, n_nodes)) < 0.1).astype(jnp.float32)

    # GATConv(heads=1) parameters (W pre-transposed for x @ W).
    w = jax.random.normal(kw, (nhid, nhid), dtype=jnp.float32) * 0.1
    att_src = jax.random.normal(ks, (1, nhid), dtype=jnp.float32) * 0.1
    att_dst = jax.random.normal(kd, (1, nhid), dtype=jnp.float32) * 0.1
    bias = jax.random.normal(kb, (1, nhid), dtype=jnp.float32) * 0.1

    out_x, out_adj = gat_norm_forward(x, adj, w, att_src, att_dst, bias,
                                      dropout=0.5, att_dropout=0.6,
                                      norm_scale=1.0, key=kdrop, tile_m=128)
    jax.block_until_ready(out_x)
    jax.block_until_ready(out_adj)

    # Sanity checks on the forward semantics.
    assert out_x.shape == (n_nodes, nhid) and out_x.dtype == jnp.float32
    assert bool(jnp.all(jnp.isfinite(out_x)))
    assert bool(jnp.all(out_x >= 0.0))          # ReLU output is non-negative
    assert bool(jnp.any(out_x > 0.0))
    assert bool(jnp.all(out_adj == adj))        # adjacency passed through untouched

    print("KERNEL_OK")
</pallas_src>

<mosaic_0001>
module attributes {stable_mosaic.version = 11 : i64} {
  func.func @_dropout_linear_kernel(%arg0: i32, %arg1: memref<128x128xf32, #tpu.memory_space<vmem>>, %arg2: memref<128x128xf32, #tpu.memory_space<vmem>>, %arg3: memref<128x128xbf16, #tpu.memory_space<vmem>>, %arg4: memref<1x128xf32, #tpu.memory_space<vmem>>, %arg5: memref<1x128xf32, #tpu.memory_space<vmem>>, %arg6: memref<128x128xbf16, #tpu.memory_space<vmem>>, %arg7: memref<1x128xf32, #tpu.memory_space<vmem>>, %arg8: memref<128x1xf32, #tpu.memory_space<vmem>>) attributes {dimension_semantics = [#tpu.dimension_semantics<parallel>], iteration_bounds = array<i64: 2>, scalar_prefetch = 0 : i64, scratch_operands = 0 : i64, tpu.core_type = #tpu.core_type<tc>, window_params = [{transform_indices = @transform_0, window_bounds = array<i64: 128, 128>}, {transform_indices = @transform_1, window_bounds = array<i64: 128, 128>}, {pipeline_mode = #tpu.pipeline_mode<synchronous>, transform_indices = @transform_2, window_bounds = array<i64: 128, 128>}, {pipeline_mode = #tpu.pipeline_mode<synchronous>, transform_indices = @transform_3, window_bounds = array<i64: 1, 128>}, {pipeline_mode = #tpu.pipeline_mode<synchronous>, transform_indices = @transform_4, window_bounds = array<i64: 1, 128>}, {transform_indices = @transform_5, window_bounds = array<i64: 128, 128>}, {transform_indices = @transform_6, window_bounds = array<i64: 1, 128>}, {transform_indices = @transform_7, window_bounds = array<i64: 128, 1>}]} {
    %c0 = arith.constant 0 : index
    %c0_0 = arith.constant 0 : index
    %0 = vector.load %arg1[%c0, %c0_0] : memref<128x128xf32, #tpu.memory_space<vmem>>, vector<128x128xf32>
    %c0_1 = arith.constant 0 : index
    %c0_2 = arith.constant 0 : index
    %1 = vector.load %arg2[%c0_1, %c0_2] : memref<128x128xf32, #tpu.memory_space<vmem>>, vector<128x128xf32>
    %2 = arith.mulf %0, %1 : vector<128x128xf32>
    %3 = arith.truncf %2 : vector<128x128xf32> to vector<128x128xbf16>
    %c0_3 = arith.constant 0 : index
    %c0_4 = arith.constant 0 : index
    %4 = vector.load %arg3[%c0_3, %c0_4] : memref<128x128xbf16, #tpu.memory_space<vmem>>, vector<128x128xbf16>
    %cst = arith.constant dense<0.000000e+00> : vector<128x128xf32>
    %5 = tpu.matmul %3, %4, %cst {dimension_numbers = #tpu.dot_dimension_numbers<[1], [0], [0], [1], [0, 0, 1, 1], [], []>} : vector<128x128xbf16>, vector<128x128xbf16>, vector<128x128xf32> -> vector<128x128xf32>
    %6 = arith.truncf %5 : vector<128x128xf32> to vector<128x128xbf16>
    %c0_5 = arith.constant 0 : index
    %c0_6 = arith.constant 0 : index
    %7 = vector.load %arg6[%c0_5, %c0_6] : memref<128x128xbf16, #tpu.memory_space<vmem>>, vector<128x128xbf16>
    tpu.vector_store %arg6[%c0_5, %c0_6], %6 {strides = array<i32>} : memref<128x128xbf16, #tpu.memory_space<vmem>>, vector<128x128xbf16>,
    %c0_7 = arith.constant 0 : index
    %c0_8 = arith.constant 0 : index
    %8 = vector.load %arg5[%c0_7, %c0_8] : memref<1x128xf32, #tpu.memory_space<vmem>>, vector<1x128xf32>
    %9 = vector.broadcast %8 : vector<1x128xf32> to vector<128x128xf32>
    %10 = arith.mulf %5, %9 : vector<128x128xf32>
    %cst_9 = arith.constant dense<0.000000e+00> : vector<128xf32>
    %11 = vector.multi_reduction <add>, %10, %cst_9 [1] : vector<128x128xf32> to vector<128xf32>
    %12 = vector.shape_cast %11 : vector<128xf32> to vector<128x1xf32>
    %c0_10 = arith.constant 0 : index
    %c0_11 = arith.constant 0 : index
    %13 = vector.load %arg8[%c0_10, %c0_11] : memref<128x1xf32, #tpu.memory_space<vmem>>, vector<128x1xf32>
    tpu.vector_store %arg8[%c0_10, %c0_11], %12 {strides = array<i32>} : memref<128x1xf32, #tpu.memory_space<vmem>>, vector<128x1xf32>,
    %c0_12 = arith.constant 0 : index
    %c0_13 = arith.constant 0 : index
    %14 = vector.load %arg4[%c0_12, %c0_13] : memref<1x128xf32, #tpu.memory_space<vmem>>, vector<1x128xf32>
    %15 = vector.broadcast %14 : vector<1x128xf32> to vector<128x128xf32>
    %16 = arith.mulf %5, %15 : vector<128x128xf32>
    %cst_14 = arith.constant dense<0.000000e+00> : vector<128xf32>
    %17 = vector.multi_reduction <add>, %16, %cst_14 [1] : vector<128x128xf32> to vector<128xf32>
    %18 = vector.shape_cast %17 : vector<128xf32> to vector<128x1xf32>
    %19 = vector.shape_cast %18 : vector<128x1xf32> to vector<1x128xf32>
    %c0_15 = arith.constant 0 : index
    %c0_16 = arith.constant 0 : index
    %20 = vector.load %arg7[%c0_15, %c0_16] : memref<1x128xf32, #tpu.memory_space<vmem>>, vector<1x128xf32>
    tpu.vector_store %arg7[%c0_15, %c0_16], %19 {strides = array<i32>} : memref<1x128xf32, #tpu.memory_space<vmem>>, vector<1x128xf32>,
    return
  }
  func.func @transform_0(%arg0: i32) -> (i32, i32) {
    %c0_i32 = arith.constant 0 : i32
    %c0_i32_0 = arith.constant 0 : i32
    return %arg0, %c0_i32 : i32, i32
  }
  func.func @transform_1(%arg0: i32) -> (i32, i32) {
    %c0_i32 = arith.constant 0 : i32
    %c0_i32_0 = arith.constant 0 : i32
    return %arg0, %c0_i32 : i32, i32
  }
  func.func @transform_2(%arg0: i32) -> (i32, i32) {
    %c0_i32 = arith.constant 0 : i32
    %c0_i32_0 = arith.constant 0 : i32
    %c0_i32_1 = arith.constant 0 : i32
    return %c0_i32, %c0_i32_0 : i32, i32
  }
  func.func @transform_3(%arg0: i32) -> (i32, i32) {
    %c0_i32 = arith.constant 0 : i32
    %c0_i32_0 = arith.constant 0 : i32
    %c0_i32_1 = arith.constant 0 : i32
    return %c0_i32, %c0_i32_0 : i32, i32
  }
  func.func @transform_4(%arg0: i32) -> (i32, i32) {
    %c0_i32 = arith.constant 0 : i32
    %c0_i32_0 = arith.constant 0 : i32
    %c0_i32_1 = arith.constant 0 : i32
    return %c0_i32, %c0_i32_0 : i32, i32
  }
  func.func @transform_5(%arg0: i32) -> (i32, i32) {
    %c0_i32 = arith.constant 0 : i32
    %c0_i32_0 = arith.constant 0 : i32
    return %arg0, %c0_i32 : i32, i32
  }
  func.func @transform_6(%arg0: i32) -> (i32, i32) {
    %c0_i32 = arith.constant 0 : i32
    %c0_i32_0 = arith.constant 0 : i32
    return %c0_i32, %arg0 : i32, i32
  }
  func.func @transform_7(%arg0: i32) -> (i32, i32) {
    %c0_i32 = arith.constant 0 : i32
    %c0_i32_0 = arith.constant 0 : i32
    return %arg0, %c0_i32 : i32, i32
  }
}

</mosaic_0001>

<llo_original>
// kernel: tpu_custom_call.1
$region0: #{tpu_custom_call.1}
  #allocation0 [shape = 'u32[]', space=smem, size = 0x4, offset = 0x4, fixed_abs, tag = 'smem constant byte address 0x4 - core index']
  #allocation1 [shape = 'u32[144,128]{1,0:T(1,128)}', space=vmem, size = 0x12000, scoped, tag = 'internal scratch']
  %s0 = inlined_call_operand.hbm [shape: f32[256,128], index: 0, kind: input, shape index: {}]
  %s1 = inlined_call_operand.hbm [shape: f32[256,128], index: 1, kind: input, shape index: {}]
  %s2 = inlined_call_operand.hbm [shape: bf16[128,128], index: 2, kind: input, shape index: {}]
  %s3 = inlined_call_operand.vmem [shape: f32[1,128], index: 3, kind: input, shape index: {}]
  %s4 = inlined_call_operand.vmem [shape: f32[1,128], index: 4, kind: input, shape index: {}]
  %s5 = inlined_call_operand.hbm [shape: bf16[256,128], index: 5, kind: output, shape index: {0}]
  %s6 = inlined_call_operand.hbm [shape: f32[1,256], index: 6, kind: output, shape index: {1}]
  %s7 = inlined_call_operand.vmem [shape: f32[256,1], index: 7, kind: output, shape index: {2}]
  %8 = xla_tuple %s5, %s6, %s7
  %s9 = sld [smem:[#allocation0]]
  $region81: #{tpu_custom_call.1} parent=0
    _
  %s11 = ssub.s32 1, %s9
  %s12 = scalar_select 0, %s11, %s9
  $region1: #{tpu_custom_call.1} parent=0
    #allocation2 [shape = 'u8[131072]{0}', space=vmem, size = 0x20000, scoped, tag = 'input window, operand 0']
    #allocation3 [shape = 's32[2]{0}', space=sflag, size = 0x8, scoped, tag = 'scoped memory for tpu_custom_call.1']
    #allocation4 [shape = 's32[2]{0}', space=sflag, size = 0x8, scoped, tag = 'scoped memory for tpu_custom_call.1']
    #allocation5 [shape = 'u8[131072]{0}', space=vmem, size = 0x20000, scoped, tag = 'input window, operand 1']
    #allocation6 [shape = 's32[2]{0}', space=sflag, size = 0x8, scoped, tag = 'scoped memory for tpu_custom_call.1']
    #allocation7 [shape = 'u8[32768]{0}', space=vmem, size = 0x8000, scoped, tag = 'input window, operand 2, single buffered']
    #allocation8 [shape = 'u8[65536]{0}', space=vmem, size = 0x10000, scoped, tag = 'output window, operand 0']
    #allocation9 [shape = 'u8[1024]{0}', space=vmem, size = 0x400, scoped, tag = 'output window, operand 1']
    #allocation10 [shape = 's32[2]{0}', space=sflag, size = 0x8, scoped, tag = 'scoped memory for tpu_custom_call.1']
    %13 = vsyncpa [#allocation3], 0
    %s14 = scalar_lea.sflag [#allocation3], 1
    %15 = vsyncpa %s14, 0
    %16 = vsyncpa [#allocation6], 0
    %s17 = scalar_lea.sflag [#allocation6], 1
    %18 = vsyncpa %s17, 0
    %19 = vsyncpa [#allocation4], 0
    %s20 = scalar_lea.sflag [#allocation4], 1
    %21 = vsyncpa %s20, 0
    %22 = vsyncpa [#allocation10], 0
    %s23 = scalar_lea.sflag [#allocation10], 1
    %24 = vsyncpa %s23, 0
    loop: start=0, step=1, limit=4
    $region2: #{tpu_custom_call.1} parent=1 // loop_pre_header
      _
    $region3: #{tpu_custom_call.1} parent=1 // loop_header
      %s26 = sphi 0, %s30
      %p27 = scmp.ge.s32.totalorder %s26, 4
      %s36 = sphi 0, %s38
      %s39 = sphi 0, %s36
      %s40 = sphi 0, %s39
      %s56 = sphi 0, %s40
      %s62 = sphi 0, %s64
      %s65 = sphi 0, %s62
      %s66 = sphi 0, %s65
      %s82 = sphi 0, %s66
      %s86 = sphi 0, %s86
      %s88 = sphi 0, %s86
      %s89 = sphi 0, %s88
      %s103 = sphi 0, %s89
      %s107 = sphi 0, %s107
      %s109 = sphi 0, %s107
      %s110 = sphi 0, %s109
      %s124 = sphi 0, %s110
      %s128 = sphi 0, %s128
      %s130 = sphi 0, %s128
      %s131 = sphi 0, %s130
      %s145 = sphi 0, %s131
      %s151 = sphi 0, %s153
      %s154 = sphi 0, %s151
      %s155 = sphi 0, %s154
      %s171 = sphi 0, %s155
      %s177 = sphi 0, %s179
      %s180 = sphi 0, %s177
      %s181 = sphi 0, %s180
      %s197 = sphi 0, %s181
      %s203 = sphi 0, %s205
      %s206 = sphi 0, %s203
      %s207 = sphi 0, %s206
      %s223 = sphi 0, %s207
    $region4: #{tpu_custom_call.1} parent=1 // loop_header_branch
      %29 = sbr.rel (%p27) target = $region8
    $region5: #{tpu_custom_call.1} parent=1 // loop_body
      %s31 = ssub.s32 %s26, 1
      %s32 = ssub.s32 %s26, 2
      %s33 = sadd.s32 %s26, 1
      %s34 = ssub.s32 %s26, %s33
      %p35 = scmp.eq.s32.totalorder %s34, 0
      %s37 = sadd.s32 %s36, 1
      %s38 = scalar_select %p35, %s36, %s37
      %p41 = pneg %p35
      %p42 = scmp.eq.s32.totalorder %s26, 1
      %p43 = por %p41, %p42
      %p44 = scmp.ne.s32.totalorder %s36, %s39
      %p45 = scmp.eq.s32.totalorder %s26, 0
      %p46 = por %p44, %p45
      %p47 = scmp.ne.s32.totalorder %s36, %s39
      %p48 = scmp.eq.s32.totalorder %s31, 1
      %p49 = por %p47, %p48
      %p50 = scmp.ne.s32.totalorder %s39, %s40
      %p51 = scmp.eq.s32.totalorder %s31, 0
      %p52 = por %p50, %p51
      %p53 = scmp.ne.s32.totalorder %s39, %s40
      %p54 = scmp.eq.s32.totalorder %s32, 1
      %p55 = por %p53, %p54
      %p57 = scmp.ne.s32.totalorder %s40, %s56
      %p58 = scmp.eq.s32.totalorder %s32, 0
      %p59 = por %p57, %p58
      %s60 = ssub.s32 %s26, %s33
      %p61 = scmp.eq.s32.totalorder %s60, 0
      %s63 = sadd.s32 %s62, 1
      %s64 = scalar_select %p61, %s62, %s63
      %p67 = pneg %p61
      %p68 = scmp.eq.s32.totalorder %s26, 1
      %p69 = por %p67, %p68
      %p70 = scmp.ne.s32.totalorder %s62, %s65
      %p71 = scmp.eq.s32.totalorder %s26, 0
      %p72 = por %p70, %p71
      %p73 = scmp.ne.s32.totalorder %s62, %s65
      %p74 = scmp.eq.s32.totalorder %s31, 1
      %p75 = por %p73, %p74
      %p76 = scmp.ne.s32.totalorder %s65, %s66
      %p77 = scmp.eq.s32.totalorder %s31, 0
      %p78 = por %p76, %p77
      %p79 = scmp.ne.s32.totalorder %s65, %s66
      %p80 = scmp.eq.s32.totalorder %s32, 1
      %p81 = por %p79, %p80
      %p83 = scmp.ne.s32.totalorder %s66, %s82
      %p84 = scmp.eq.s32.totalorder %s32, 0
      %p85 = por %p83, %p84
      %s87 = sadd.s32 %s86, 1
      %p90 = scmp.eq.s32.totalorder %s26, 1
      %p91 = scmp.ne.s32.totalorder %s86, %s88
      %p92 = scmp.eq.s32.totalorder %s26, 0
      %p93 = por %p91, %p92
      %p94 = scmp.ne.s32.totalorder %s86, %s88
      %p95 = scmp.eq.s32.totalorder %s31, 1
      %p96 = por %p94, %p95
      %p97 = scmp.ne.s32.totalorder %s88, %s89
      %p98 = scmp.eq.s32.totalorder %s31, 0
      %p99 = por %p97, %p98
      %p100 = scmp.ne.s32.totalorder %s88, %s89
      %p101 = scmp.eq.s32.totalorder %s32, 1
      %p102 = por %p100, %p101
      %p104 = scmp.ne.s32.totalorder %s89, %s103
      %p105 = scmp.eq.s32.totalorder %s32, 0
      %p106 = por %p104, %p105
      %s108 = sadd.s32 %s107, 1
      %p111 = scmp.eq.s32.totalorder %s26, 1
      %p112 = scmp.ne.s32.totalorder %s107, %s109
      %p113 = scmp.eq.s32.totalorder %s26, 0
      %p114 = por %p112, %p113
      %p115 = scmp.ne.s32.totalorder %s107, %s109
      %p116 = scmp.eq.s32.totalorder %s31, 1
      %p117 = por %p115, %p116
      %p118 = scmp.ne.s32.totalorder %s109, %s110
      %p119 = scmp.eq.s32.totalorder %s31, 0
      %p120 = por %p118, %p119
      %p121 = scmp.ne.s32.totalorder %s109, %s110
      %p122 = scmp.eq.s32.totalorder %s32, 1
      %p123 = por %p121, %p122
      %p125 = scmp.ne.s32.totalorder %s110, %s124
      %p126 = scmp.eq.s32.totalorder %s32, 0
      %p127 = por %p125, %p126
      %s129 = sadd.s32 %s128, 1
      %p132 = scmp.eq.s32.totalorder %s26, 1
      %p133 = scmp.ne.s32.totalorder %s128, %s130
      %p134 = scmp.eq.s32.totalorder %s26, 0
      %p135 = por %p133, %p134
      %p136 = scmp.ne.s32.totalorder %s128, %s130
      %p137 = scmp.eq.s32.totalorder %s31, 1
      %p138 = por %p136, %p137
      %p139 = scmp.ne.s32.totalorder %s130, %s131
      %p140 = scmp.eq.s32.totalorder %s31, 0
      %p141 = por %p139, %p140
      %p142 = scmp.ne.s32.totalorder %s130, %s131
      %p143 = scmp.eq.s32.totalorder %s32, 1
      %p144 = por %p142, %p143
      %p146 = scmp.ne.s32.totalorder %s131, %s145
      %p147 = scmp.eq.s32.totalorder %s32, 0
      %p148 = por %p146, %p147
      %s149 = ssub.s32 %s26, %s33
      %p150 = scmp.eq.s32.totalorder %s149, 0
      %s152 = sadd.s32 %s151, 1
      %s153 = scalar_select %p150, %s151, %s152
      %p156 = pneg %p150
      %p157 = scmp.eq.s32.totalorder %s26, 1
      %p158 = por %p156, %p157
      %p159 = scmp.ne.s32.totalorder %s151, %s154
      %p160 = scmp.eq.s32.totalorder %s26, 0
      %p161 = por %p159, %p160
      %p162 = scmp.ne.s32.totalorder %s151, %s154
      %p163 = scmp.eq.s32.totalorder %s31, 1
      %p164 = por %p162, %p163
      %p165 = scmp.ne.s32.totalorder %s154, %s155
      %p166 = scmp.eq.s32.totalorder %s31, 0
      %p167 = por %p165, %p166
      %p168 = scmp.ne.s32.totalorder %s154, %s155
      %p169 = scmp.eq.s32.totalorder %s32, 1
      %p170 = por %p168, %p169
      %p172 = scmp.ne.s32.totalorder %s155, %s171
      %p173 = scmp.eq.s32.totalorder %s32, 0
      %p174 = por %p172, %p173
      %s175 = ssub.s32 %s26, %s33
      %p176 = scmp.eq.s32.totalorder %s175, 0
      %s178 = sadd.s32 %s177, 1
      %s179 = scalar_select %p176, %s177, %s178
      %p182 = pneg %p176
      %p183 = scmp.eq.s32.totalorder %s26, 1
      %p184 = por %p182, %p183
      %p185 = scmp.ne.s32.totalorder %s177, %s180
      %p186 = scmp.eq.s32.totalorder %s26, 0
      %p187 = por %p185, %p186
      %p188 = scmp.ne.s32.totalorder %s177, %s180
      %p189 = scmp.eq.s32.totalorder %s31, 1
      %p190 = por %p188, %p189
      %p191 = scmp.ne.s32.totalorder %s180, %s181
      %p192 = scmp.eq.s32.totalorder %s31, 0
      %p193 = por %p191, %p192
      %p194 = scmp.ne.s32.totalorder %s180, %s181
      %p195 = scmp.eq.s32.totalorder %s32, 1
      %p196 = por %p194, %p195
      %p198 = scmp.ne.s32.totalorder %s181, %s197
      %p199 = scmp.eq.s32.totalorder %s32, 0
      %p200 = por %p198, %p199
      %s201 = ssub.s32 %s26, %s33
      %p202 = scmp.eq.s32.totalorder %s201, 0
      %s204 = sadd.s32 %s203, 1
      %s205 = scalar_select %p202, %s203, %s204
      %p208 = pneg %p202
      %p209 = scmp.eq.s32.totalorder %s26, 1
      %p210 = por %p208, %p209
      %p211 = scmp.ne.s32.totalorder %s203, %s206
      %p212 = scmp.eq.s32.totalorder %s26, 0
      %p213 = por %p211, %p212
      %p214 = scmp.ne.s32.totalorder %s203, %s206
      %p215 = scmp.eq.s32.totalorder %s31, 1
      %p216 = por %p214, %p215
      %p217 = scmp.ne.s32.totalorder %s206, %s207
      %p218 = scmp.eq.s32.totalorder %s31, 0
      %p219 = por %p217, %p218
      %p220 = scmp.ne.s32.totalorder %s206, %s207
      %p221 = scmp.eq.s32.totalorder %s32, 1
      %p222 = por %p220, %p221
      %p224 = scmp.ne.s32.totalorder %s207, %s223
      %p225 = scmp.eq.s32.totalorder %s32, 0
      %p226 = por %p224, %p225
      %p227 = scmp.le.s32.totalorder 1, %s26
      %p228 = scmp.lt.s32.totalorder %s26, 3
      %p229 = pnand %p227, %p228
      %p230 = pneg %p229
      // Predicated region
      $region9: #{tpu_custom_call.1} parent=5 // pred_check
        _
      $region10: #{tpu_custom_call.1} parent=5 // pred_check_branch
        %232 = sbr.rel (%p229) target = $region12
      $region11: #{tpu_custom_call.1} parent=5 // pred_region
        %s233 = ssub.s32 %s26, 1
        // Predicated region
        $region13: #{tpu_custom_call.1} parent=11 // pred_check
          %p234 = pneg %p99
        $region14: #{tpu_custom_call.1} parent=11 // pred_check_branch
          %236 = sbr.rel (%p234) target = $region16
        $region15: #{tpu_custom_call.1} parent=11 // pred_region
          %s238 = ssub.s32 1024, 1024
          %239 = vsyncadd [#allocation6], %s238
          %s240 = sshll.u32 [#allocation7], 4
          %s241 = int_to_ptr.vmem [resolvable:$true] %s240
          %246 = dma.hbm_to_vmem [thread:$0]  %s2, 1024, %s241, [#allocation6], 64, 64, 4
        $region16: #{tpu_custom_call.1} parent=11 // pred_fallthru
          _
        // Predicated region
        $region17: #{tpu_custom_call.1} parent=11 // pred_check
          %p247 = pneg %p120
        $region18: #{tpu_custom_call.1} parent=11 // pred_check_branch
          %249 = sbr.rel (%p247) target = $region20
        $region19: #{tpu_custom_call.1} parent=11 // pred_region
          _
        $region20: #{tpu_custom_call.1} parent=11 // pred_fallthru
          _
        // Predicated region
        $region21: #{tpu_custom_call.1} parent=11 // pred_check
          %p250 = pneg %p141
        $region22: #{tpu_custom_call.1} parent=11 // pred_check_branch
          %252 = sbr.rel (%p250) target = $region24
        $region23: #{tpu_custom_call.1} parent=11 // pred_region
          _
        $region24: #{tpu_custom_call.1} parent=11 // pred_fallthru
          _
      $region12: #{tpu_custom_call.1} parent=5 // pred_fallthru
        _
      %p253 = scmp.lt.s32.totalorder %s26, 2
      // Predicated region
      $region25: #{tpu_custom_call.1} parent=5 // pred_check
        %p254 = pneg %p253
      $region26: #{tpu_custom_call.1} parent=5 // pred_check_branch
        %256 = sbr.rel (%p254) target = $region28
      $region27: #{tpu_custom_call.1} parent=5 // pred_region
        // Predicated region
        $region29: #{tpu_custom_call.1} parent=27 // pred_check
          %p257 = pneg %p46
        $region30: #{tpu_custom_call.1} parent=27 // pred_check_branch
          %259 = sbr.rel (%p257) target = $region32
        $region31: #{tpu_custom_call.1} parent=27 // pred_region
          %s260 = sand.u32 %s36, 1
          %s261 = scalar_lea.sflag [#allocation3], %s260
          %s262 = sand.u32 %s36, 1
          %s263 = smul.addr %s262, 128
          %s264 = scalar_lea.vmem [#allocation2], %s263
          %s265 = smul.u32 16, %s26
          %s267 = ssub.s32 2048, 2048
          %268 = vsyncadd %s261, %s267
          %s269 = smul.addr %s265, 128
          %s270 = scalar_lea.hbm %s0, %s269
          %s271 = sshll.u32 %s264, 4
          %s272 = int_to_ptr.vmem [resolvable:$true] %s271
          %277 = dma.hbm_to_vmem [thread:$0]  %s270, 2048, %s272, %s261, 128, 128, 8
        $region32: #{tpu_custom_call.1} parent=27 // pred_fallthru
          _
        // Predicated region
        $region33: #{tpu_custom_call.1} parent=27 // pred_check
          %p278 = pneg %p72
        $region34: #{tpu_custom_call.1} parent=27 // pred_check_branch
          %280 = sbr.rel (%p278) target = $region36
        $region35: #{tpu_custom_call.1} parent=27 // pred_region
          %s281 = sand.u32 %s26, 1
          %s282 = scalar_lea.sflag [#allocation6], %s281
          %s283 = sand.u32 %s62, 1
          %s284 = smul.addr %s283, 128
          %s285 = scalar_lea.vmem [#allocation5], %s284
          %s286 = smul.u32 16, %s26
          %s288 = ssub.s32 2048, 2048
          %289 = vsyncadd %s282, %s288
          %s290 = smul.addr %s286, 128
          %s291 = scalar_lea.hbm %s1, %s290
          %s292 = sshll.u32 %s285, 4
          %s293 = int_to_ptr.vmem [resolvable:$true] %s292
          %298 = dma.hbm_to_vmem [thread:$0]  %s291, 2048, %s293, %s282, 128, 128, 8
        $region36: #{tpu_custom_call.1} parent=27 // pred_fallthru
          _
      $region28: #{tpu_custom_call.1} parent=5 // pred_fallthru
        _
      %p299 = scmp.le.s32.totalorder 1, %s26
      %p300 = scmp.lt.s32.totalorder %s26, 3
      %p301 = pnand %p299, %p300
      %p302 = pneg %p301
      // Predicated region
      $region37: #{tpu_custom_call.1} parent=5 // pred_check
        _
      $region38: #{tpu_custom_call.1} parent=5 // pred_check_branch
        %304 = sbr.rel (%p301) target = $region40
      $region39: #{tpu_custom_call.1} parent=5 // pred_region
        %s305 = ssub.s32 %s26, 1
        %s306 = sand.u32 %s39, 1
        %s307 = scalar_lea.sflag [#allocation3], %s306
        %s308 = sand.u32 %s39, 1
        %s309 = smul.addr %s308, 128
        %s310 = scalar_lea.vmem [#allocation2], %s309
        // Predicated region
        $region41: #{tpu_custom_call.1} parent=39 // pred_check
          %p311 = pneg %p52
        $region42: #{tpu_custom_call.1} parent=39 // pred_check_branch
          %313 = sbr.rel (%p311) target = $region44
        $region43: #{tpu_custom_call.1} parent=39 // pred_region
          %314 = dma.done %s307, 2048
        $region44: #{tpu_custom_call.1} parent=39 // pred_fallthru
          _
        %s315 = sand.u32 %s31, 1
        %s316 = scalar_lea.sflag [#allocation6], %s315
        %s317 = sand.u32 %s65, 1
        %s318 = smul.addr %s317, 128
        %s319 = scalar_lea.vmem [#allocation5], %s318
        // Predicated region
        $region45: #{tpu_custom_call.1} parent=39 // pred_check
          %p320 = pneg %p78
        $region46: #{tpu_custom_call.1} parent=39 // pred_check_branch
          %322 = sbr.rel (%p320) target = $region48
        $region47: #{tpu_custom_call.1} parent=39 // pred_region
          %323 = dma.done %s316, 2048
        $region48: #{tpu_custom_call.1} parent=39 // pred_fallthru
          _
        // Predicated region
        $region49: #{tpu_custom_call.1} parent=39 // pred_check
          %p324 = pneg %p99
        $region50: #{tpu_custom_call.1} parent=39 // pred_check_branch
          %326 = sbr.rel (%p324) target = $region52
        $region51: #{tpu_custom_call.1} parent=39 // pred_region
          %327 = dma.done [#allocation6], 1024
        $region52: #{tpu_custom_call.1} parent=39 // pred_fallthru
          _
        %s328 = sand.u32 %s39, 1
        %s329 = scalar_lea.sflag [#allocation3], %s328
        %s330 = sand.u32 %s39, 1
        %s331 = smul.addr %s330, 128
        %s332 = scalar_lea.vmem [#allocation2], %s331
        %p333 = pneg %p52
        %p334 = pneg %p49
        %s335 = sand.u32 %s31, 1
        %s336 = scalar_lea.sflag [#allocation6], %s335
        %s337 = sand.u32 %s65, 1
        %s338 = smul.addr %s337, 128
        %s339 = scalar_lea.vmem [#allocation5], %s338
        %p340 = pneg %p78
        %p341 = pneg %p75
        %p342 = pneg %p99
        %p343 = pneg %p96
        %p344 = pneg %p120
        %p345 = pneg %p117
        %p346 = pneg %p141
        %p347 = pneg %p138
        %p348 = pneg %p167
        %p349 = pneg %p164
        %s350 = sand.u32 %s154, 1
        %s351 = scalar_lea.sflag [#allocation4], %s350
        %s352 = sand.u32 %s154, 1
        %s353 = smul.addr %s352, 64
        %s354 = scalar_lea.vmem [#allocation8], %s353
        %p355 = pneg %p193
        %p356 = pneg %p190
        %s357 = sand.u32 %s180, 1
        %s358 = scalar_lea.sflag [#allocation10], %s357
        %s359 = sand.u32 %s180, 1
        %s360 = scalar_lea.vmem [#allocation9], %s359
        %p361 = pneg %p219
        %p362 = pneg %p216
        %s363 = smul.u32 16, %s31
        %p364 = scmp.lt.s32.totalorder %s363, 31
        %s365 = scalar_select %p364, %s363, 31
        %s366 = smul.addr %s365, 8
        %s367 = scalar_lea.vmem %s7, %s366
        %s368 = smul.u32 16, %s31
        %s369 = smul.u32 16, %s31
        %s370 = smul.u32 16, %s31
        %s371 = smul.u32 16, %s31
        %p372 = scmp.lt.s32.totalorder %s371, 31
        %s373 = scalar_select %p372, %s371, 31
        %s374 = smul.addr %s373, 8
        %s375 = scalar_lea.vmem %s7, %s374
        %s376 = smul.u32 16, %s31
        %v378 = vld [vmem:[%s310] sm:$0xff]
        %v379 = vld [vmem:[%s310 + $0x8] sm:$0xff]
        %v380 = vld [vmem:[%s310 + $0x10] sm:$0xff]
        %v381 = vld [vmem:[%s310 + $0x18] sm:$0xff]
        %v382 = vld [vmem:[%s310 + $0x20] sm:$0xff]
        %v383 = vld [vmem:[%s310 + $0x28] sm:$0xff]
        %v384 = vld [vmem:[%s310 + $0x30] sm:$0xff]
        %v385 = vld [vmem:[%s310 + $0x38] sm:$0xff]
        %v386 = vld [vmem:[%s310 + $0x40] sm:$0xff]
        %v387 = vld [vmem:[%s310 + $0x48] sm:$0xff]
        %v388 = vld [vmem:[%s310 + $0x50] sm:$0xff]
        %v389 = vld [vmem:[%s310 + $0x58] sm:$0xff]
        %v390 = vld [vmem:[%s310 + $0x60] sm:$0xff]
        %v391 = vld [vmem:[%s310 + $0x68] sm:$0xff]
        %v392 = vld [vmem:[%s310 + $0x70] sm:$0xff]
        %v393 = vld [vmem:[%s310 + $0x78] sm:$0xff]
        %v394 = vld [vmem:[%s319] sm:$0xff]
        %v395 = vld [vmem:[%s319 + $0x8] sm:$0xff]
        %v396 = vld [vmem:[%s319 + $0x10] sm:$0xff]
        %v397 = vld [vmem:[%s319 + $0x18] sm:$0xff]
        %v398 = vld [vmem:[%s319 + $0x20] sm:$0xff]
        %v399 = vld [vmem:[%s319 + $0x28] sm:$0xff]
        %v400 = vld [vmem:[%s319 + $0x30] sm:$0xff]
        %v401 = vld [vmem:[%s319 + $0x38] sm:$0xff]
        %v402 = vld [vmem:[%s319 + $0x40] sm:$0xff]
        %v403 = vld [vmem:[%s319 + $0x48] sm:$0xff]
        %v404 = vld [vmem:[%s319 + $0x50] sm:$0xff]
        %v405 = vld [vmem:[%s319 + $0x58] sm:$0xff]
        %v406 = vld [vmem:[%s319 + $0x60] sm:$0xff]
        %v407 = vld [vmem:[%s319 + $0x68] sm:$0xff]
        %v408 = vld [vmem:[%s319 + $0x70] sm:$0xff]
        %v409 = vld [vmem:[%s319 + $0x78] sm:$0xff]
        %v410 = vmul.f32 %v378, %v394
        %v411 = vmul.f32 %v379, %v395
        %v412 = vmul.f32 %v380, %v396
        %v413 = vmul.f32 %v381, %v397
        %v414 = vmul.f32 %v382, %v398
        %v415 = vmul.f32 %v383, %v399
        %v416 = vmul.f32 %v384, %v400
        %v417 = vmul.f32 %v385, %v401
        %v418 = vmul.f32 %v386, %v402
        %v419 = vmul.f32 %v387, %v403
        %v420 = vmul.f32 %v388, %v404
        %v421 = vmul.f32 %v389, %v405
        %v422 = vmul.f32 %v390, %v406
        %v423 = vmul.f32 %v391, %v407
        %v424 = vmul.f32 %v392, %v408
        %v425 = vmul.f32 %v393, %v409
        %v426 = vpack.c.bf16 %v411, %v410
        %v427 = vpack.c.bf16 %v413, %v412
        %v428 = vpack.c.bf16 %v415, %v414
        %v429 = vpack.c.bf16 %v417, %v416
        %v430 = vpack.c.bf16 %v419, %v418
        %v431 = vpack.c.bf16 %v421, %v420
        %v432 = vpack.c.bf16 %v423, %v422
        %v433 = vpack.c.bf16 %v425, %v424
        %v434 = vld [vmem:[#allocation7] sm:$0xf]
        %v435 = vld [vmem:[#allocation7 + $0x4] sm:$0xf]
        %v436 = vld [vmem:[#allocation7 + $0x8] sm:$0xf]
        %v437 = vld [vmem:[#allocation7 + $0xc] sm:$0xf]
        %v438 = vld [vmem:[#allocation7 + $0x10] sm:$0xf]
        %v439 = vld [vmem:[#allocation7 + $0x14] sm:$0xf]
        %v440 = vld [vmem:[#allocation7 + $0x18] sm:$0xf]
        %v441 = vld [vmem:[#allocation7 + $0x1c] sm:$0xf]
        %v442 = vld [vmem:[#allocation7 + $0x20] sm:$0xf]
        %v443 = vld [vmem:[#allocation7 + $0x24] sm:$0xf]
        %v444 = vld [vmem:[#allocation7 + $0x28] sm:$0xf]
        %v445 = vld [vmem:[#allocation7 + $0x2c] sm:$0xf]
        %v446 = vld [vmem:[#allocation7 + $0x30] sm:$0xf]
        %v447 = vld [vmem:[#allocation7 + $0x34] sm:$0xf]
        %v448 = vld [vmem:[#allocation7 + $0x38] sm:$0xf]
        %v449 = vld [vmem:[#allocation7 + $0x3c] sm:$0xf]
        %v466 = vunpack.c.l.b16 %v434
        %v467 = vunpack.c.l.b16 %v435
        %v468 = vunpack.c.l.b16 %v436
        %v469 = vunpack.c.l.b16 %v437
        %v470 = vunpack.c.l.b16 %v438
        %v471 = vunpack.c.l.b16 %v439
        %v472 = vunpack.c.l.b16 %v440
        %v473 = vunpack.c.l.b16 %v441
        %v474 = vunpack.c.l.b16 %v442
        %v475 = vunpack.c.l.b16 %v443
        %v476 = vunpack.c.l.b16 %v444
        %v477 = vunpack.c.l.b16 %v445
        %v478 = vunpack.c.l.b16 %v446
        %v479 = vunpack.c.l.b16 %v447
        %v480 = vunpack.c.l.b16 %v448
        %v481 = vunpack.c.l.b16 %v449
        %v482 = vpack.c.b16 %v467, %v466
        %v483 = vpack.c.b16 %v469, %v468
        %v484 = vpack.c.b16 %v471, %v470
        %v485 = vpack.c.b16 %v473, %v472
        %v486 = vpack.c.b16 %v475, %v474
        %v487 = vpack.c.b16 %v477, %v476
        %v488 = vpack.c.b16 %v479, %v478
        %v489 = vpack.c.b16 %v481, %v480
        %498 = vmatprep.subr.bf16.mxu0 0
        %499 = vmatpush1.bf16.msra.mxu0 %v489
        %500 = vmatprep.subr.bf16.mxu0 0
        %501 = vmatpush1.bf16.msra.mxu0 %v488
        %502 = vmatprep.subr.bf16.mxu0 0
        %503 = vmatpush1.bf16.msra.mxu0 %v487
        %504 = vmatprep.subr.bf16.mxu0 0
        %505 = vmatpush1.bf16.msra.mxu0 %v486
        %506 = vmatprep.subr.bf16.mxu0 0
        %507 = vmatpush1.bf16.msra.mxu0 %v485
        %508 = vmatprep.subr.bf16.mxu0 0
        %509 = vmatpush1.bf16.msra.mxu0 %v484
        %510 = vmatprep.subr.bf16.mxu0 0
        %511 = vmatpush1.bf16.msra.mxu0 %v483
        %512 = vmatprep.subr.bf16.mxu0 0
        %513 = vmatpush1.bf16.msra.mxu0 %v482
        %514 = vmatprep.subr.bf16.mxu0 0
        %515 = vmatpush2.bf16.msra.mxu0 0
        %516 = vmatprep.subr.bf16.mxu0 0
        %517 = vmatpush2.bf16.msra.mxu0 0
        %518 = vmatprep.subr.bf16.mxu0 0
        %519 = vmatpush2.bf16.msra.mxu0 0
        %520 = vmatprep.subr.bf16.mxu0 0
        %521 = vmatpush2.bf16.msra.mxu0 0
        %522 = vmatprep.subr.bf16.mxu0 0
        %523 = vmatpush2.bf16.msra.mxu0 0
        %524 = vmatprep.subr.bf16.mxu0 0
        %525 = vmatpush2.bf16.msra.mxu0 0
        %526 = vmatprep.subr.bf16.mxu0 0
        %527 = vmatpush2.bf16.msra.mxu0 0
        %528 = vmatprep.subr.bf16.mxu0 0
        %529 = vmatpush2.bf16.msra.mxu0 0
        %530 = vmatprep.mubr.bf16.mxu0 0
        %531 = vmatmul.mubr.bf16.gmra.mxu0 %v426
        %v532 = vpop.f32.mrf.mxu0
        %v533 = vadd.f32 0.0, %v532
        %v534 = vpop.f32.mrf.mxu0
        %v535 = vpop.f32.mrf.mxu0
        %v536 = vadd.f32 0.0, %v535
        %v537 = vpop.f32.mrf.mxu0
        %538 = vmatprep.mubr.bf16.mxu0 0
        %539 = vmatmul.mubr.bf16.gmra.mxu0 %v427
        %v540 = vpop.f32.mrf.mxu0
        %v541 = vadd.f32 0.0, %v540
        %v542 = vpop.f32.mrf.mxu0
        %v543 = vpop.f32.mrf.mxu0
        %v544 = vadd.f32 0.0, %v543
        %v545 = vpop.f32.mrf.mxu0
        %546 = vmatprep.mubr.bf16.mxu0 0
        %547 = vmatmul.mubr.bf16.gmra.mxu0 %v428
        %v548 = vpop.f32.mrf.mxu0
        %v549 = vadd.f32 0.0, %v548
        %v550 = vpop.f32.mrf.mxu0
        %v551 = vpop.f32.mrf.mxu0
        %v552 = vadd.f32 0.0, %v551
        %v553 = vpop.f32.mrf.mxu0
        %554 = vmatprep.mubr.bf16.mxu0 0
        %555 = vmatmul.mubr.bf16.gmra.mxu0 %v429
        %v556 = vpop.f32.mrf.mxu0
        %v557 = vadd.f32 0.0, %v556
        %v558 = vpop.f32.mrf.mxu0
        %v559 = vpop.f32.mrf.mxu0
        %v560 = vadd.f32 0.0, %v559
        %v561 = vpop.f32.mrf.mxu0
        %562 = vmatprep.mubr.bf16.mxu0 0
        %563 = vmatmul.mubr.bf16.gmra.mxu0 %v430
        %v564 = vpop.f32.mrf.mxu0
        %v565 = vadd.f32 0.0, %v564
        %v566 = vpop.f32.mrf.mxu0
        %v567 = vpop.f32.mrf.mxu0
        %v568 = vadd.f32 0.0, %v567
        %v569 = vpop.f32.mrf.mxu0
        %570 = vmatprep.mubr.bf16.mxu0 0
        %571 = vmatmul.mubr.bf16.gmra.mxu0 %v431
        %v572 = vpop.f32.mrf.mxu0
        %v573 = vadd.f32 0.0, %v572
        %v574 = vpop.f32.mrf.mxu0
        %v575 = vpop.f32.mrf.mxu0
        %v576 = vadd.f32 0.0, %v575
        %v577 = vpop.f32.mrf.mxu0
        %578 = vmatprep.mubr.bf16.mxu0 0
        %579 = vmatmul.mubr.bf16.gmra.mxu0 %v432
        %v580 = vpop.f32.mrf.mxu0
        %v581 = vadd.f32 0.0, %v580
        %v582 = vpop.f32.mrf.mxu0
        %v583 = vpop.f32.mrf.mxu0
        %v584 = vadd.f32 0.0, %v583
        %v585 = vpop.f32.mrf.mxu0
        %586 = vmatprep.mubr.bf16.mxu0 0
        %587 = vmatmul.mubr.bf16.gmra.mxu0 %v433
        %v588 = vpop.f32.mrf.mxu0
        %v589 = vadd.f32 0.0, %v588
        %v590 = vpop.f32.mrf.mxu0
        %v591 = vpop.f32.mrf.mxu0
        %v592 = vadd.f32 0.0, %v591
        %v593 = vpop.f32.mrf.mxu0
        %594 = vdwg.mxu0
        %v595 = vpack.c.bf16 %v536, %v533
        %v596 = vpack.c.bf16 %v544, %v541
        %v597 = vpack.c.bf16 %v552, %v549
        %v598 = vpack.c.bf16 %v560, %v557
        %v599 = vpack.c.bf16 %v568, %v565
        %v600 = vpack.c.bf16 %v576, %v573
        %v601 = vpack.c.bf16 %v584, %v581
        %v602 = vpack.c.bf16 %v592, %v589
        %v611 = vunpack.c.l.b16 %v595
        %v612 = vunpack.c.h.b16 %v595
        %v613 = vunpack.c.l.b16 %v596
        %v614 = vunpack.c.h.b16 %v596
        %v615 = vunpack.c.l.b16 %v597
        %v616 = vunpack.c.h.b16 %v597
        %v617 = vunpack.c.l.b16 %v598
        %v618 = vunpack.c.h.b16 %v598
        %v619 = vunpack.c.l.b16 %v599
        %v620 = vunpack.c.h.b16 %v599
        %v621 = vunpack.c.l.b16 %v600
        %v622 = vunpack.c.h.b16 %v600
        %v623 = vunpack.c.l.b16 %v601
        %v624 = vunpack.c.h.b16 %v601
        %v625 = vunpack.c.l.b16 %v602
        %v626 = vunpack.c.h.b16 %v602
        %v627 = vpack.c.b16 %v611, %v611
        %v628 = vpack.c.b16 %v612, %v612
        %v629 = vpack.c.b16 %v613, %v613
        %v630 = vpack.c.b16 %v614, %v614
        %v631 = vpack.c.b16 %v615, %v615
        %v632 = vpack.c.b16 %v616, %v616
        %v633 = vpack.c.b16 %v617, %v617
        %v634 = vpack.c.b16 %v618, %v618
        %v635 = vpack.c.b16 %v619, %v619
        %v636 = vpack.c.b16 %v620, %v620
        %v637 = vpack.c.b16 %v621, %v621
        %v638 = vpack.c.b16 %v622, %v622
        %v639 = vpack.c.b16 %v623, %v623
        %v640 = vpack.c.b16 %v624, %v624
        %v641 = vpack.c.b16 %v625, %v625
        %v642 = vpack.c.b16 %v626, %v626
        %659 = vst [vmem:[%s354] sm:$0xf] %v627
        %660 = vst [vmem:[%s354 + $0x4] sm:$0xf] %v628
        %661 = vst [vmem:[%s354 + $0x8] sm:$0xf] %v629
        %662 = vst [vmem:[%s354 + $0xc] sm:$0xf] %v630
        %663 = vst [vmem:[%s354 + $0x10] sm:$0xf] %v631
        %664 = vst [vmem:[%s354 + $0x14] sm:$0xf] %v632
        %665 = vst [vmem:[%s354 + $0x18] sm:$0xf] %v633
        %666 = vst [vmem:[%s354 + $0x1c] sm:$0xf] %v634
        %667 = vst [vmem:[%s354 + $0x20] sm:$0xf] %v635
        %668 = vst [vmem:[%s354 + $0x24] sm:$0xf] %v636
        %669 = vst [vmem:[%s354 + $0x28] sm:$0xf] %v637
        %670 = vst [vmem:[%s354 + $0x2c] sm:$0xf] %v638
        %671 = vst [vmem:[%s354 + $0x30] sm:$0xf] %v639
        %672 = vst [vmem:[%s354 + $0x34] sm:$0xf] %v640
        %673 = vst [vmem:[%s354 + $0x38] sm:$0xf] %v641
        %674 = vst [vmem:[%s354 + $0x3c] sm:$0xf] %v642
        %v675 = vld [vmem:[%s4] sm:$0x1]
        %v677 = vlaneseq
        %v678 = vshrl.u32 %v677, 7
        %v679 = vsub.s32 0, %v678
        %v680 = vrot.slane %v675, %v679
        %v682 = vmul.f32 %v533, %v680
        %v683 = vmul.f32 %v536, %v680
        %v684 = vmul.f32 %v541, %v680
        %v685 = vmul.f32 %v544, %v680
        %v686 = vmul.f32 %v549, %v680
        %v687 = vmul.f32 %v552, %v680
        %v688 = vmul.f32 %v557, %v680
        %v689 = vmul.f32 %v560, %v680
        %v690 = vmul.f32 %v565, %v680
        %v691 = vmul.f32 %v568, %v680
        %v692 = vmul.f32 %v573, %v680
        %v693 = vmul.f32 %v576, %v680
        %v694 = vmul.f32 %v581, %v680
        %v695 = vmul.f32 %v584, %v680
        %v696 = vmul.f32 %v589, %v680
        %v697 = vmul.f32 %v592, %v680
        %698 = vadd.xlane.f32.xlu0 %v682
        %v699 = vpop.xlane.xlu0 %698
        %700 = vadd.xlane.f32.xlu0 %v683
        %v701 = vpop.xlane.xlu0 %700
        %702 = vadd.xlane.f32.xlu0 %v684
        %v703 = vpop.xlane.xlu0 %702
        %704 = vadd.xlane.f32.xlu0 %v685
        %v705 = vpop.xlane.xlu0 %704
        %706 = vadd.xlane.f32.xlu0 %v686
        %v707 = vpop.xlane.xlu0 %706
        %708 = vadd.xlane.f32.xlu0 %v687
        %v709 = vpop.xlane.xlu0 %708
        %710 = vadd.xlane.f32.xlu0 %v688
        %v711 = vpop.xlane.xlu0 %710
        %712 = vadd.xlane.f32.xlu0 %v689
        %v713 = vpop.xlane.xlu0 %712
        %714 = vadd.xlane.f32.xlu0 %v690
        %v715 = vpop.xlane.xlu0 %714
        %716 = vadd.xlane.f32.xlu0 %v691
        %v717 = vpop.xlane.xlu0 %716
        %718 = vadd.xlane.f32.xlu0 %v692
        %v719 = vpop.xlane.xlu0 %718
        %720 = vadd.xlane.f32.xlu0 %v693
        %v721 = vpop.xlane.xlu0 %720
        %722 = vadd.xlane.f32.xlu0 %v694
        %v723 = vpop.xlane.xlu0 %722
        %724 = vadd.xlane.f32.xlu0 %v695
        %v725 = vpop.xlane.xlu0 %724
        %726 = vadd.xlane.f32.xlu0 %v696
        %v727 = vpop.xlane.xlu0 %726
        %728 = vadd.xlane.f32.xlu0 %v697
        %v729 = vpop.xlane.xlu0 %728
        %vm730 = vcmask 7168
        %731 = vst.msk [vmem:[%s375] sm:$0xff] %vm730, %v699
        %732 = vst.msk [vmem:[%s375 + $0x8] sm:$0xff] %vm730, %v701
        %733 = vst.msk [vmem:[%s375 + $0x10] sm:$0xff] %vm730, %v703
        %734 = vst.msk [vmem:[%s375 + $0x18] sm:$0xff] %vm730, %v705
        %735 = vst.msk [vmem:[%s375 + $0x20] sm:$0xff] %vm730, %v707
        %736 = vst.msk [vmem:[%s375 + $0x28] sm:$0xff] %vm730, %v709
        %737 = vst.msk [vmem:[%s375 + $0x30] sm:$0xff] %vm730, %v711
        %738 = vst.msk [vmem:[%s375 + $0x38] sm:$0xff] %vm730, %v713
        %739 = vst.msk [vmem:[%s375 + $0x40] sm:$0xff] %vm730, %v715
        %740 = vst.msk [vmem:[%s375 + $0x48] sm:$0xff] %vm730, %v717
        %741 = vst.msk [vmem:[%s375 + $0x50] sm:$0xff] %vm730, %v719
        %742 = vst.msk [vmem:[%s375 + $0x58] sm:$0xff] %vm730, %v721
        %743 = vst.msk [vmem:[%s375 + $0x60] sm:$0xff] %vm730, %v723
        %744 = vst.msk [vmem:[%s375 + $0x68] sm:$0xff] %vm730, %v725
        %745 = vst.msk [vmem:[%s375 + $0x70] sm:$0xff] %vm730, %v727
        %746 = vst.msk [vmem:[%s375 + $0x78] sm:$0xff] %vm730, %v729
        %v747 = vld [vmem:[%s3] sm:$0x1]
        %v749 = vlaneseq
        %v750 = vshrl.u32 %v749, 7
        %v751 = vsub.s32 0, %v750
        %v752 = vrot.slane %v747, %v751
        %v754 = vmul.f32 %v533, %v752
        %v755 = vmul.f32 %v536, %v752
        %v756 = vmul.f32 %v541, %v752
        %v757 = vmul.f32 %v544, %v752
        %v758 = vmul.f32 %v549, %v752
        %v759 = vmul.f32 %v552, %v752
        %v760 = vmul.f32 %v557, %v752
        %v761 = vmul.f32 %v560, %v752
        %v762 = vmul.f32 %v565, %v752
        %v763 = vmul.f32 %v568, %v752
        %v764 = vmul.f32 %v573, %v752
        %v765 = vmul.f32 %v576, %v752
        %v766 = vmul.f32 %v581, %v752
        %v767 = vmul.f32 %v584, %v752
        %v768 = vmul.f32 %v589, %v752
        %v769 = vmul.f32 %v592, %v752
        %770 = vadd.xlane.f32.xlu0 %v754
        %v771 = vpop.xlane.xlu0 %770
        %772 = vadd.xlane.f32.xlu0 %v755
        %v773 = vpop.xlane.xlu0 %772
        %774 = vadd.xlane.f32.xlu0 %v756
        %v775 = vpop.xlane.xlu0 %774
        %776 = vadd.xlane.f32.xlu0 %v757
        %v777 = vpop.xlane.xlu0 %776
        %778 = vadd.xlane.f32.xlu0 %v758
        %v779 = vpop.xlane.xlu0 %778
        %780 = vadd.xlane.f32.xlu0 %v759
        %v781 = vpop.xlane.xlu0 %780
        %782 = vadd.xlane.f32.xlu0 %v760
        %v783 = vpop.xlane.xlu0 %782
        %784 = vadd.xlane.f32.xlu0 %v761
        %v785 = vpop.xlane.xlu0 %784
        %786 = vadd.xlane.f32.xlu0 %v762
        %v787 = vpop.xlane.xlu0 %786
        %788 = vadd.xlane.f32.xlu0 %v763
        %v789 = vpop.xlane.xlu0 %788
        %790 = vadd.xlane.f32.xlu0 %v764
        %v791 = vpop.xlane.xlu0 %790
        %792 = vadd.xlane.f32.xlu0 %v765
        %v793 = vpop.xlane.xlu0 %792
        %794 = vadd.xlane.f32.xlu0 %v766
        %v795 = vpop.xlane.xlu0 %794
        %796 = vadd.xlane.f32.xlu0 %v767
        %v797 = vpop.xlane.xlu0 %796
        %798 = vadd.xlane.f32.xlu0 %v768
        %v799 = vpop.xlane.xlu0 %798
        %800 = vadd.xlane.f32.xlu0 %v769
        %v801 = vpop.xlane.xlu0 %800
        %v818 = vlaneseq
        %v819 = vand.u32 %v818, 127
        %v820 = vlaneseq
        %v821 = vshrl.u32 %v820, 7
        %v822 = vsub.s32 %v819, %v821
        %v823 = vrot.slane %v771, %v822
        %v824 = vadd.s32 %v819, 4294967288
        %v825 = vlaneseq
        %v826 = vshrl.u32 %v825, 7
        %v827 = vsub.s32 %v824, %v826
        %v828 = vrot.slane %v773, %v827
        %vm829 = vcmask 130112
        %v830 = vsel %vm829, %v828, %v823
        %v831 = vadd.s32 %v819, 4294967280
        %v832 = vlaneseq
        %v833 = vshrl.u32 %v832, 7
        %v834 = vsub.s32 %v831, %v833
        %v835 = vrot.slane %v775, %v834
        %vm836 = vcmask 195712
        %v837 = vsel %vm836, %v835, %v830
        %v838 = vadd.s32 %v819, 4294967272
        %v839 = vlaneseq
        %v840 = vshrl.u32 %v839, 7
        %v841 = vsub.s32 %v838, %v840
        %v842 = vrot.slane %v777, %v841
        %vm843 = vcmask 261312
        %v844 = vsel %vm843, %v842, %v837
        %v845 = vadd.s32 %v819, 4294967264
        %v846 = vlaneseq
        %v847 = vshrl.u32 %v846, 7
        %v848 = vsub.s32 %v845, %v847
        %v849 = vrot.slane %v779, %v848
        %vm850 = vcmask 326912
        %v851 = vsel %vm850, %v849, %v844
        %v852 = vadd.s32 %v819, 4294967256
        %v853 = vlaneseq
        %v854 = vshrl.u32 %v853, 7
        %v855 = vsub.s32 %v852, %v854
        %v856 = vrot.slane %v781, %v855
        %vm857 = vcmask 392512
        %v858 = vsel %vm857, %v856, %v851
        %v859 = vadd.s32 %v819, 4294967248
        %v860 = vlaneseq
        %v861 = vshrl.u32 %v860, 7
        %v862 = vsub.s32 %v859, %v861
        %v863 = vrot.slane %v783, %v862
        %vm864 = vcmask 458112
        %v865 = vsel %vm864, %v863, %v858
        %v866 = vadd.s32 %v819, 4294967240
        %v867 = vlaneseq
        %v868 = vshrl.u32 %v867, 7
        %v869 = vsub.s32 %v866, %v868
        %v870 = vrot.slane %v785, %v869
        %vm871 = vcmask 523712
        %v872 = vsel %vm871, %v870, %v865
        %v873 = vadd.s32 %v819, 4294967232
        %v874 = vlaneseq
        %v875 = vshrl.u32 %v874, 7
        %v876 = vsub.s32 %v873, %v875
        %v877 = vrot.slane %v787, %v876
        %vm878 = vcmask 589312
        %v879 = vsel %vm878, %v877, %v872
        %v880 = vadd.s32 %v819, 4294967224
        %v881 = vlaneseq
        %v882 = vshrl.u32 %v881, 7
        %v883 = vsub.s32 %v880, %v882
        %v884 = vrot.slane %v789, %v883
        %vm885 = vcmask 654912
        %v886 = vsel %vm885, %v884, %v879
        %v887 = vadd.s32 %v819, 4294967216
        %v888 = vlaneseq
        %v889 = vshrl.u32 %v888, 7
        %v890 = vsub.s32 %v887, %v889
        %v891 = vrot.slane %v791, %v890
        %vm892 = vcmask 720512
        %v893 = vsel %vm892, %v891, %v886
        %v894 = vadd.s32 %v819, 4294967208
        %v895 = vlaneseq
        %v896 = vshrl.u32 %v895, 7
        %v897 = vsub.s32 %v894, %v896
        %v898 = vrot.slane %v793, %v897
        %vm899 = vcmask 786112
        %v900 = vsel %vm899, %v898, %v893
        %v901 = vadd.s32 %v819, 4294967200
        %v902 = vlaneseq
        %v903 = vshrl.u32 %v902, 7
        %v904 = vsub.s32 %v901, %v903
        %v905 = vrot.slane %v795, %v904
        %vm906 = vcmask 851712
        %v907 = vsel %vm906, %v905, %v900
        %v908 = vadd.s32 %v819, 4294967192
        %v909 = vlaneseq
        %v910 = vshrl.u32 %v909, 7
        %v911 = vsub.s32 %v908, %v910
        %v912 = vrot.slane %v797, %v911
        %vm913 = vcmask 917312
        %v914 = vsel %vm913, %v912, %v907
        %v915 = vadd.s32 %v819, 4294967184
        %v916 = vlaneseq
        %v917 = vshrl.u32 %v916, 7
        %v918 = vsub.s32 %v915, %v917
        %v919 = vrot.slane %v799, %v918
        %vm920 = vcmask 982912
        %v921 = vsel %vm920, %v919, %v914
        %v922 = vadd.s32 %v819, 4294967176
        %v923 = vlaneseq
        %v924 = vshrl.u32 %v923, 7
        %v925 = vsub.s32 %v922, %v924
        %v926 = vrot.slane %v801, %v925
        %vm927 = vcmask 1048512
        %v928 = vsel %vm927, %v926, %v921
        %930 = vst [vmem:[%s360] sm:$0x1] %v928
        %s931 = sand.u32 %s154, 1
        %s932 = scalar_lea.sflag [#allocation4], %s931
        %s933 = sand.u32 %s154, 1
        %s934 = smul.addr %s933, 64
        %s935 = scalar_lea.vmem [#allocation8], %s934
        %s936 = sand.u32 %s180, 1
        %s937 = scalar_lea.sflag [#allocation10], %s936
        %s938 = sand.u32 %s180, 1
        %s939 = scalar_lea.vmem [#allocation9], %s938
        %s940 = smul.u32 16, %s31
        %p941 = scmp.lt.s32.totalorder %s940, 31
        %s942 = scalar_select %p941, %s940, 31
        %s943 = smul.addr %s942, 8
        %s944 = scalar_lea.vmem %s7, %s943
        // Predicated region
        $region53: #{tpu_custom_call.1} parent=39 // pred_check
          %p945 = pneg %p164
        $region54: #{tpu_custom_call.1} parent=39 // pred_check_branch
          %947 = sbr.rel (%p945) target = $region56
        $region55: #{tpu_custom_call.1} parent=39 // pred_region
          %s948 = smul.u32 16, %s31
          %s950 = ssub.s32 1024, 1024
          %951 = vsyncadd %s932, %s950
          %s952 = smul.addr %s948, 64
          %s953 = scalar_lea.hbm %s5, %s952
          %s954 = sshll.u32 %s935, 4
          %s955 = int_to_ptr.vmem [resolvable:$true] %s954
          %960 = dma.vmem_to_hbm [thread:$0]  %s955, 1024, %s953, %s932, 64, 64, 4
        $region56: #{tpu_custom_call.1} parent=39 // pred_fallthru
          _
        // Predicated region
        $region57: #{tpu_custom_call.1} parent=39 // pred_check
          %p961 = pneg %p190
        $region58: #{tpu_custom_call.1} parent=39 // pred_check_branch
          %963 = sbr.rel (%p961) target = $region60
        $region59: #{tpu_custom_call.1} parent=39 // pred_region
          %s965 = ssub.s32 16, 16
          %966 = vsyncadd %s937, %s965
          %s967 = smul.addr %s31, 16
          %s968 = scalar_lea.hbm %s6, %s967
          %s970 = sshll.u32 %s939, 4
          %s971 = int_to_ptr.vmem [resolvable:$true] %s970
          %973 = dma.vmem_to_hbm [thread:$0]  %s971, 16, %s968, %s937
        $region60: #{tpu_custom_call.1} parent=39 // pred_fallthru
          _
        // Predicated region
        $region61: #{tpu_custom_call.1} parent=39 // pred_check
          %p974 = pneg %p216
        $region62: #{tpu_custom_call.1} parent=39 // pred_check_branch
          %976 = sbr.rel (%p974) target = $region64
        $region63: #{tpu_custom_call.1} parent=39 // pred_region
          %s977 = smul.u32 16, %s31
        $region64: #{tpu_custom_call.1} parent=39 // pred_fallthru
          _
      $region40: #{tpu_custom_call.1} parent=5 // pred_fallthru
        _
      %p978 = scmp.le.s32.totalorder 2, %s26
      // Predicated region
      $region65: #{tpu_custom_call.1} parent=5 // pred_check
        %p979 = pneg %p978
      $region66: #{tpu_custom_call.1} parent=5 // pred_check_branch
        %981 = sbr.rel (%p979) target = $region68
      $region67: #{tpu_custom_call.1} parent=5 // pred_region
        %s982 = ssub.s32 %s26, 2
        // Predicated region
        $region69: #{tpu_custom_call.1} parent=67 // pred_check
          %p983 = pneg %p170
        $region70: #{tpu_custom_call.1} parent=67 // pred_check_branch
          %985 = sbr.rel (%p983) target = $region72
        $region71: #{tpu_custom_call.1} parent=67 // pred_region
          %s986 = sand.u32 %s155, 1
          %s987 = scalar_lea.sflag [#allocation4], %s986
          %s988 = sand.u32 %s155, 1
          %s989 = smul.addr %s988, 64
          %s990 = scalar_lea.vmem [#allocation8], %s989
          %991 = dma.done %s987, 1024
        $region72: #{tpu_custom_call.1} parent=67 // pred_fallthru
          _
        // Predicated region
        $region73: #{tpu_custom_call.1} parent=67 // pred_check
          %p992 = pneg %p196
        $region74: #{tpu_custom_call.1} parent=67 // pred_check_branch
          %994 = sbr.rel (%p992) target = $region76
        $region75: #{tpu_custom_call.1} parent=67 // pred_region
          %s995 = sand.u32 %s181, 1
          %s996 = scalar_lea.sflag [#allocation10], %s995
          %s997 = sand.u32 %s181, 1
          %s998 = scalar_lea.vmem [#allocation9], %s997
          %999 = dma.done %s996, 16
        $region76: #{tpu_custom_call.1} parent=67 // pred_fallthru
          _
        // Predicated region
        $region77: #{tpu_custom_call.1} parent=67 // pred_check
          %p1000 = pneg %p222
        $region78: #{tpu_custom_call.1} parent=67 // pred_check_branch
          %1002 = sbr.rel (%p1000) target = $region80
        $region79: #{tpu_custom_call.1} parent=67 // pred_region
          %s1003 = smul.u32 16, %s32
          %p1004 = scmp.lt.s32.totalorder %s1003, 31
          %s1005 = scalar_select %p1004, %s1003, 31
          %s1006 = smul.addr %s1005, 8
          %s1007 = scalar_lea.vmem %s7, %s1006
        $region80: #{tpu_custom_call.1} parent=67 // pred_fallthru
          _
      $region68: #{tpu_custom_call.1} parent=5 // pred_fallthru
        _
    $region6: #{tpu_custom_call.1} parent=1 // loop_footer
      %s30 = sadd.s32 1, %s26
    $region7: #{tpu_custom_call.1} parent=1 // loop_footer_branch
      %25 = sbr.rel target = $region3
    $region8: #{tpu_custom_call.1} parent=1 // loop_exit
      _
    %1008 = vsyncpa [#allocation3], 1
    %s1009 = scalar_lea.sflag [#allocation3], 1
    %1010 = vsyncpa %s1009, 1
    %1011 = vsyncpa [#allocation6], 1
    %s1012 = scalar_lea.sflag [#allocation6], 1
    %1013 = vsyncpa %s1012, 1
    %1014 = vsyncpa [#allocation4], 1
    %s1015 = scalar_lea.sflag [#allocation4], 1
    %1016 = vsyncpa %s1015, 1
    %1017 = vsyncpa [#allocation10], 1
    %s1018 = scalar_lea.sflag [#allocation10], 1
    %1019 = vsyncpa %s1018, 1

</llo_original>
